<compile_context>
chip_gen: v6e
topology: v6e:2x2x1
jax: 0.10.0
libtpu: 0.0.40
codegen_flags: <defaults>
</compile_context>

<pallas_src>
import functools

import jax
import jax.numpy as jnp
from jax import lax
from jax.experimental import pallas as pl
from jax.experimental.pallas import tpu as pltpu

_MIB = 1024 * 1024


def _round_up(x, m):
    return ((x + m - 1) // m) * m


def _vmem_limit_bytes():
    """Generation-aware scoped VMEM limit: physical capacity minus headroom."""
    cap = None
    try:
        cap = getattr(pltpu.get_tpu_info(), "vmem_capacity_bytes", None)
    except Exception:
        cap = None
    if not cap:
        cap = 64 * _MIB  # conservative fallback (v7x physical per-TC VMEM)
    return max(32 * _MIB, int(cap) - 16 * _MIB)


def _resblock_kernel(x_ref, wd_ref, bd_ref, wu_ref, bu_ref, g_ref, b_ref,
                     o_ref, acc_ref, *, eps):
    # x_ref : (tm, dim)  f32      wd_ref: (dim, tk)  bf16    bd_ref: (1, tk)  f32
    # wu_ref: (tk, dim)  bf16     bu/g/b: (1, dim)   f32
    # o_ref : (tm, dim)  f32      acc_ref: (tm, dim) f32 VMEM scratch
    k = pl.program_id(1)

    x_f32 = x_ref[...].astype(jnp.float32)   # residual path (f32)
    x_lo = x_f32.astype(jnp.bfloat16)        # MXU operand (bf16)

    # Seed the proj_up accumulator with residual + up-bias on the first k step.
    @pl.when(k == 0)
    def _():
        acc_ref[...] = x_f32 + bu_ref[...]

    # proj_down chunk (MXU, bf16 x bf16 -> f32 accumulate) + bias.
    h = jnp.dot(x_lo, wd_ref[...], preferred_element_type=jnp.float32)
    h = h + bd_ref[...]
    # exact GELU (erf form, matches nn.GELU default), f32 math.
    h = 0.5 * h * (1.0 + lax.erf(h * jnp.float32(0.7071067811865476)))
    # dropout1: identity (inference)
    # proj_up chunk (MXU), accumulate in f32.
    acc_ref[...] += jnp.dot(h.astype(jnp.bfloat16), wu_ref[...],
                            preferred_element_type=jnp.float32)
    # dropout2: identity (inference)

    # Last hidden chunk: LayerNorm (biased variance, like nn.LayerNorm) + store.
    @pl.when(k == pl.num_programs(1) - 1)
    def _():
        up = acc_ref[...]
        mean = jnp.mean(up, axis=-1, keepdims=True)
        cent = up - mean
        var = jnp.mean(cent * cent, axis=-1, keepdims=True)
        normed = cent * lax.rsqrt(var + jnp.float32(eps))
        o_ref[...] = (normed * g_ref[...] + b_ref[...]).astype(o_ref.dtype)


def residual_block(x, params, *, eps=1e-5, tm=256, _force_tk=None):
    """x: [N, dim] float32. params: weights in right-multiply layout."""
    N, dim = x.shape
    hidden = params["wd"].shape[1]

    # Row tile: multiple of 16 (bf16 packing); capped so the row grid axis has
    # at least 2 steps when N allows (v7x has 2 TensorCores on the "parallel"
    # axis); padded N keeps every block full-size.
    tm_eff = min(tm, _round_up(N, 16), _round_up(pl.cdiv(N, 2), 16))
    tm_eff = max(16, tm_eff)
    n_pad = _round_up(N, tm_eff)
    x_p = x if n_pad == N else jnp.pad(x, ((0, n_pad - N), (0, 0)))
    n_rows = n_pad // tm_eff

    # Pick the hidden tile tk from the generation-aware VMEM budget.
    vmem_limit = _vmem_limit_bytes()
    act_bytes = 5 * tm_eff * dim * 4          # x (2 bufs) + out (2 bufs) + acc
    weight_budget = vmem_limit - act_bytes - 6 * _MIB  # misc/compiler headroom
    per_col = 8 * dim                          # double-buffered bf16 Wd+Wu / hidden col
    if _force_tk is not None:
        tk = int(_force_tk)
    elif per_col * hidden <= weight_budget:
        tk = hidden                            # weights fully resident, 1 k-step
    else:
        tk = int(max(128, min(2048, weight_budget // per_col)))
        tk = (tk // 256) * 256 if tk >= 256 else 128   # 256-aligned MXU tiles
    hidden_pad = _round_up(hidden, tk)
    n_k = hidden_pad // tk

    # bf16 matmul operands; biases / LN params stay f32.  Zero-pad the hidden
    # axis when streaming (padded columns contribute exactly 0).
    wd = params["wd"].astype(jnp.bfloat16)
    wu = params["wu"].astype(jnp.bfloat16)
    bd = params["bd"].astype(jnp.float32)
    bu = params["bu"].astype(jnp.float32)
    gamma = params["gamma"].astype(jnp.float32)
    beta = params["beta"].astype(jnp.float32)
    if hidden_pad != hidden:
        hp = hidden_pad - hidden
        wd = jnp.pad(wd, ((0, 0), (0, hp)))
        bd = jnp.pad(bd, ((0, 0), (0, hp)))
        wu = jnp.pad(wu, ((0, hp), (0, 0)))

    kernel = functools.partial(_resblock_kernel, eps=eps)

    weight_fetches = 1 if n_k == 1 else n_rows   # streamed weights re-fetched per row tile
    cost = pl.CostEstimate(
        flops=4 * n_pad * dim * hidden_pad,                  # two matmuls
        transcendentals=n_pad * hidden_pad,                  # erf
        bytes_accessed=(2 * n_pad * dim * 4                  # x in + out (f32)
                        + weight_fetches * 2 * dim * hidden_pad * 2
                        + (hidden_pad + 3 * dim) * 4))

    out = pl.pallas_call(
        kernel,
        out_shape=jax.ShapeDtypeStruct((n_pad, dim), x.dtype),
        grid_spec=pltpu.PrefetchScalarGridSpec(
            num_scalar_prefetch=0,
            grid=(n_rows, n_k),
            in_specs=[
                pl.BlockSpec((tm_eff, dim), lambda i, k: (i, 0)),  # x tile
                pl.BlockSpec((dim, tk), lambda i, k: (0, k)),      # Wd chunk (bf16)
                pl.BlockSpec((1, tk), lambda i, k: (0, k)),        # bd chunk
                pl.BlockSpec((tk, dim), lambda i, k: (k, 0)),      # Wu chunk (bf16)
                pl.BlockSpec((1, dim), lambda i, k: (0, 0)),       # bu
                pl.BlockSpec((1, dim), lambda i, k: (0, 0)),       # ln gamma
                pl.BlockSpec((1, dim), lambda i, k: (0, 0)),       # ln beta
            ],
            out_specs=pl.BlockSpec((tm_eff, dim), lambda i, k: (i, 0)),
            scratch_shapes=[pltpu.VMEM((tm_eff, dim), jnp.float32)],  # "up" acc
        ),
        compiler_params=pltpu.CompilerParams(
            dimension_semantics=("parallel", "arbitrary"),
            vmem_limit_bytes=int(vmem_limit)),
        cost_estimate=cost,
    )(x_p, wd, bd, wu, bu, gamma, beta)

    return out if n_pad == N else out[:N]


def init_params(key, dim, hidden_dim):
    """Deterministic synthetic init. PyTorch Linear stores weight as (out, in);
    we keep the transposed (in, out) form so the kernel can right-multiply."""
    k1, k2, k3, k4 = jax.random.split(key, 4)
    scale_d = 1.0 / jnp.sqrt(dim)
    scale_u = 1.0 / jnp.sqrt(hidden_dim)
    return {
        "wd": jax.random.uniform(k1, (dim, hidden_dim), jnp.float32,
                                 -scale_d, scale_d),
        "bd": jax.random.uniform(k2, (1, hidden_dim), jnp.float32,
                                 -scale_d, scale_d),
        "wu": jax.random.uniform(k3, (hidden_dim, dim), jnp.float32,
                                 -scale_u, scale_u),
        "bu": jax.random.uniform(k4, (1, dim), jnp.float32,
                                 -scale_u, scale_u),
        "gamma": jnp.ones((1, dim), jnp.float32),
        "beta": jnp.zeros((1, dim), jnp.float32),
    }


def _reference(x, p, eps=1e-5, use_bf16=False):
    """Pure-JAX reference. use_bf16=True mirrors the kernel's bf16 matmul
    operands (f32 accumulation) for a numerics-matched comparison."""
    if use_bf16:
        xm = x.astype(jnp.bfloat16)
        wd = p["wd"].astype(jnp.bfloat16)
        wu = p["wu"].astype(jnp.bfloat16)
    else:
        xm, wd, wu = x, p["wd"], p["wu"]
    h = jnp.dot(xm, wd, preferred_element_type=jnp.float32) + p["bd"]
    h = 0.5 * h * (1.0 + lax.erf(h * jnp.float32(0.7071067811865476)))
    if use_bf16:
        h = h.astype(jnp.bfloat16)
    up = jnp.dot(h, wu, preferred_element_type=jnp.float32) + p["bu"] + x
    mean = up.mean(-1, keepdims=True)
    var = ((up - mean) ** 2).mean(-1, keepdims=True)
    return (up - mean) * lax.rsqrt(var + eps) * p["gamma"] + p["beta"]


def _check(x2, params, out2, name):
    ref_bf = _reference(x2, params, use_bf16=True)
    ref_f32 = _reference(x2, params, use_bf16=False)
    assert jnp.allclose(out2, ref_bf, atol=5e-3, rtol=5e-3), \
        f"{name}: mismatch vs bf16-matched reference"
    assert jnp.allclose(out2, ref_f32, atol=5e-2, rtol=5e-2), \
        f"{name}: mismatch vs f32 reference"


if __name__ == "__main__":
    key = jax.random.PRNGKey(0)

    # --- primary small example (weights-resident, single k-step) -----------
    batch, seq, dim, hidden_dim = 2, 8, 32, 16
    kx, kp, kx2, kp2 = jax.random.split(key, 4)
    x3 = jax.random.normal(kx, (batch, seq, dim), jnp.float32)
    params = init_params(kp, dim, hidden_dim)

    x2 = x3.reshape(batch * seq, dim)          # flatten leading dims
    out2 = residual_block(x2, params)
    jax.block_until_ready(out2)
    _check(x2, params, out2, "resident")
    out = out2.reshape(batch, seq, dim)        # restore original shape

    # --- streamed-weight path (multi k-step, ragged hidden, padded rows) ---
    dim_b, hidden_b, n_b = 256, 384, 48
    xb = jax.random.normal(kx2, (n_b, dim_b), jnp.float32)
    params_b = init_params(kp2, dim_b, hidden_b)
    out_b = residual_block(xb, params_b, _force_tk=256)   # forces n_k = 2
    jax.block_until_ready(out_b)
    _check(xb, params_b, out_b, "streamed")

    print("KERNEL_OK")
</pallas_src>

<mosaic_0001>
module attributes {stable_mosaic.version = 11 : i64} {
  func.func @_resblock_kernel(%arg0: i32, %arg1: i32, %arg2: memref<16x32xf32, #tpu.memory_space<vmem>>, %arg3: memref<32x16xbf16, #tpu.memory_space<vmem>>, %arg4: memref<1x16xf32, #tpu.memory_space<vmem>>, %arg5: memref<16x32xbf16, #tpu.memory_space<vmem>>, %arg6: memref<1x32xf32, #tpu.memory_space<vmem>>, %arg7: memref<1x32xf32, #tpu.memory_space<vmem>>, %arg8: memref<1x32xf32, #tpu.memory_space<vmem>>, %arg9: memref<16x32xf32, #tpu.memory_space<vmem>>, %arg10: memref<16x32xf32, #tpu.memory_space<vmem>>) attributes {dimension_semantics = [#tpu.dimension_semantics<parallel>, #tpu.dimension_semantics<arbitrary>], iteration_bounds = array<i64: 1, 1>, scalar_prefetch = 0 : i64, scratch_operands = 1 : i64, tpu.core_type = #tpu.core_type<tc>, window_params = [{transform_indices = @transform_0, window_bounds = array<i64: 16, 32>}, {transform_indices = @transform_1, window_bounds = array<i64: 32, 16>}, {transform_indices = @transform_2, window_bounds = array<i64: 1, 16>}, {transform_indices = @transform_3, window_bounds = array<i64: 16, 32>}, {pipeline_mode = #tpu.pipeline_mode<synchronous>, transform_indices = @transform_4, window_bounds = array<i64: 1, 32>}, {pipeline_mode = #tpu.pipeline_mode<synchronous>, transform_indices = @transform_5, window_bounds = array<i64: 1, 32>}, {pipeline_mode = #tpu.pipeline_mode<synchronous>, transform_indices = @transform_6, window_bounds = array<i64: 1, 32>}, {transform_indices = @transform_7, window_bounds = array<i64: 16, 32>}]} {
    %c0 = arith.constant 0 : index
    %c0_0 = arith.constant 0 : index
    %0 = vector.load %arg2[%c0, %c0_0] : memref<16x32xf32, #tpu.memory_space<vmem>>, vector<16x32xf32>
    %1 = arith.truncf %0 : vector<16x32xf32> to vector<16x32xbf16>
    %c0_i32 = arith.constant 0 : i32
    %2 = arith.cmpi eq, %arg1, %c0_i32 : i32
    %3 = arith.extui %2 : i1 to i32
    %c0_i32_1 = arith.constant 0 : i32
    %4 = arith.cmpi ne, %3, %c0_i32_1 : i32
    scf.if %4 {
      %c0_18 = arith.constant 0 : index
      %c0_19 = arith.constant 0 : index
      %27 = vector.load %arg6[%c0_18, %c0_19] : memref<1x32xf32, #tpu.memory_space<vmem>>, vector<1x32xf32>
      %28 = vector.broadcast %27 : vector<1x32xf32> to vector<16x32xf32>
      %29 = arith.addf %0, %28 : vector<16x32xf32>
      %c0_20 = arith.constant 0 : index
      %c0_21 = arith.constant 0 : index
      %30 = vector.load %arg10[%c0_20, %c0_21] : memref<16x32xf32, #tpu.memory_space<vmem>>, vector<16x32xf32>
      tpu.vector_store %arg10[%c0_20, %c0_21], %29 {strides = array<i32>} : memref<16x32xf32, #tpu.memory_space<vmem>>, vector<16x32xf32>,
    } else {
    }
    %c0_2 = arith.constant 0 : index
    %c0_3 = arith.constant 0 : index
    %5 = vector.load %arg3[%c0_2, %c0_3] : memref<32x16xbf16, #tpu.memory_space<vmem>>, vector<32x16xbf16>
    %cst = arith.constant dense<0.000000e+00> : vector<16x16xf32>
    %6 = tpu.matmul %1, %5, %cst {dimension_numbers = #tpu.dot_dimension_numbers<[1], [0], [0], [1], [0, 0, 1, 1], [], []>} : vector<16x32xbf16>, vector<32x16xbf16>, vector<16x16xf32> -> vector<16x16xf32>
    %c0_4 = arith.constant 0 : index
    %c0_5 = arith.constant 0 : index
    %7 = vector.load %arg4[%c0_4, %c0_5] : memref<1x16xf32, #tpu.memory_space<vmem>>, vector<1x16xf32>
    %8 = vector.broadcast %7 : vector<1x16xf32> to vector<16x16xf32>
    %9 = arith.addf %6, %8 : vector<16x16xf32>
    %cst_6 = arith.constant 5.000000e-01 : f32
    %10 = vector.broadcast %cst_6 : f32 to vector<16x16xf32>
    %11 = arith.mulf %10, %9 : vector<16x16xf32>
    %cst_7 = arith.constant 0.707106769 : f32
    %12 = vector.broadcast %cst_7 : f32 to vector<16x16xf32>
    %13 = arith.mulf %9, %12 : vector<16x16xf32>
    %14 = math.erf %13 : vector<16x16xf32>
    %cst_8 = arith.constant 1.000000e+00 : f32
    %15 = vector.broadcast %cst_8 : f32 to vector<16x16xf32>
    %16 = arith.addf %15, %14 : vector<16x16xf32>
    %17 = arith.mulf %11, %16 : vector<16x16xf32>
    %c0_9 = arith.constant 0 : index
    %c0_10 = arith.constant 0 : index
    %18 = vector.load %arg10[%c0_9, %c0_10] : memref<16x32xf32, #tpu.memory_space<vmem>>, vector<16x32xf32>
    %19 = arith.truncf %17 : vector<16x16xf32> to vector<16x16xbf16>
    %c0_11 = arith.constant 0 : index
    %c0_12 = arith.constant 0 : index
    %20 = vector.load %arg5[%c0_11, %c0_12] : memref<16x32xbf16, #tpu.memory_space<vmem>>, vector<16x32xbf16>
    %cst_13 = arith.constant dense<0.000000e+00> : vector<16x32xf32>
    %21 = tpu.matmul %19, %20, %cst_13 {dimension_numbers = #tpu.dot_dimension_numbers<[1], [0], [0], [1], [0, 0, 1, 1], [], []>} : vector<16x16xbf16>, vector<16x32xbf16>, vector<16x32xf32> -> vector<16x32xf32>
    %22 = arith.addf %18, %21 : vector<16x32xf32>
    %c0_14 = arith.constant 0 : index
    %c0_15 = arith.constant 0 : index
    %23 = vector.load %arg10[%c0_14, %c0_15] : memref<16x32xf32, #tpu.memory_space<vmem>>, vector<16x32xf32>
    tpu.vector_store %arg10[%c0_14, %c0_15], %22 {strides = array<i32>} : memref<16x32xf32, #tpu.memory_space<vmem>>, vector<16x32xf32>,
    %c0_i32_16 = arith.constant 0 : i32
    %24 = arith.cmpi eq, %arg1, %c0_i32_16 : i32
    %25 = arith.extui %24 : i1 to i32
    %c0_i32_17 = arith.constant 0 : i32
    %26 = arith.cmpi ne, %25, %c0_i32_17 : i32
    scf.if %26 {
      %c0_18 = arith.constant 0 : index
      %c0_19 = arith.constant 0 : index
      %27 = vector.load %arg10[%c0_18, %c0_19] : memref<16x32xf32, #tpu.memory_space<vmem>>, vector<16x32xf32>
      %cst_20 = arith.constant dense<0.000000e+00> : vector<16xf32>
      %28 = vector.multi_reduction <add>, %27, %cst_20 [1] : vector<16x32xf32> to vector<16xf32>
      %29 = vector.shape_cast %28 : vector<16xf32> to vector<16x1xf32>
      %cst_21 = arith.constant 3.200000e+01 : f32
      %30 = vector.broadcast %cst_21 : f32 to vector<16x1xf32>
      %31 = arith.divf %29, %30 : vector<16x1xf32>
      %32 = vector.broadcast %31 : vector<16x1xf32> to vector<16x32xf32>
      %33 = arith.subf %27, %32 : vector<16x32xf32>
      %34 = arith.mulf %33, %33 : vector<16x32xf32>
      %cst_22 = arith.constant dense<0.000000e+00> : vector<16xf32>
      %35 = vector.multi_reduction <add>, %34, %cst_22 [1] : vector<16x32xf32> to vector<16xf32>
      %36 = vector.shape_cast %35 : vector<16xf32> to vector<16x1xf32>
      %cst_23 = arith.constant 3.200000e+01 : f32
      %37 = vector.broadcast %cst_23 : f32 to vector<16x1xf32>
      %38 = arith.divf %36, %37 : vector<16x1xf32>
      %cst_24 = arith.constant 9.99999974E-6 : f32
      %39 = vector.broadcast %cst_24 : f32 to vector<16x1xf32>
      %40 = arith.addf %38, %39 : vector<16x1xf32>
      %41 = math.rsqrt %40 : vector<16x1xf32>
      %42 = vector.broadcast %41 : vector<16x1xf32> to vector<16x32xf32>
      %43 = arith.mulf %33, %42 : vector<16x32xf32>
      %c0_25 = arith.constant 0 : index
      %c0_26 = arith.constant 0 : index
      %44 = vector.load %arg7[%c0_25, %c0_26] : memref<1x32xf32, #tpu.memory_space<vmem>>, vector<1x32xf32>
      %45 = vector.broadcast %44 : vector<1x32xf32> to vector<16x32xf32>
      %46 = arith.mulf %43, %45 : vector<16x32xf32>
      %c0_27 = arith.constant 0 : index
      %c0_28 = arith.constant 0 : index
      %47 = vector.load %arg8[%c0_27, %c0_28] : memref<1x32xf32, #tpu.memory_space<vmem>>, vector<1x32xf32>
      %48 = vector.broadcast %47 : vector<1x32xf32> to vector<16x32xf32>
      %49 = arith.addf %46, %48 : vector<16x32xf32>
      %c0_29 = arith.constant 0 : index
      %c0_30 = arith.constant 0 : index
      %50 = vector.load %arg9[%c0_29, %c0_30] : memref<16x32xf32, #tpu.memory_space<vmem>>, vector<16x32xf32>
      tpu.vector_store %arg9[%c0_29, %c0_30], %49 {strides = array<i32>} : memref<16x32xf32, #tpu.memory_space<vmem>>, vector<16x32xf32>,
    } else {
    }
    return
  }
  func.func @transform_0(%arg0: i32, %arg1: i32) -> (i32, i32) {
    %c0_i32 = arith.constant 0 : i32
    %c0_i32_0 = arith.constant 0 : i32
    return %arg0, %c0_i32 : i32, i32
  }
  func.func @transform_1(%arg0: i32, %arg1: i32) -> (i32, i32) {
    %c0_i32 = arith.constant 0 : i32
    %c0_i32_0 = arith.constant 0 : i32
    return %c0_i32, %arg1 : i32, i32
  }
  func.func @transform_2(%arg0: i32, %arg1: i32) -> (i32, i32) {
    %c0_i32 = arith.constant 0 : i32
    %c0_i32_0 = arith.constant 0 : i32
    return %c0_i32, %arg1 : i32, i32
  }
  func.func @transform_3(%arg0: i32, %arg1: i32) -> (i32, i32) {
    %c0_i32 = arith.constant 0 : i32
    %c0_i32_0 = arith.constant 0 : i32
    return %arg1, %c0_i32 : i32, i32
  }
  func.func @transform_4(%arg0: i32, %arg1: i32) -> (i32, i32) {
    %c0_i32 = arith.constant 0 : i32
    %c0_i32_0 = arith.constant 0 : i32
    %c0_i32_1 = arith.constant 0 : i32
    return %c0_i32, %c0_i32_0 : i32, i32
  }
  func.func @transform_5(%arg0: i32, %arg1: i32) -> (i32, i32) {
    %c0_i32 = arith.constant 0 : i32
    %c0_i32_0 = arith.constant 0 : i32
    %c0_i32_1 = arith.constant 0 : i32
    return %c0_i32, %c0_i32_0 : i32, i32
  }
  func.func @transform_6(%arg0: i32, %arg1: i32) -> (i32, i32) {
    %c0_i32 = arith.constant 0 : i32
    %c0_i32_0 = arith.constant 0 : i32
    %c0_i32_1 = arith.constant 0 : i32
    return %c0_i32, %c0_i32_0 : i32, i32
  }
  func.func @transform_7(%arg0: i32, %arg1: i32) -> (i32, i32) {
    %c0_i32 = arith.constant 0 : i32
    %c0_i32_0 = arith.constant 0 : i32
    return %arg0, %c0_i32 : i32, i32
  }
}

</mosaic_0001>

<llo_original>
// kernel: tpu_custom_call.1
$region0: #{tpu_custom_call.1}
  #allocation0 [shape = 'u32[]', space=smem, size = 0x4, offset = 0x4, fixed_abs, tag = 'smem constant byte address 0x4 - core index']
  #allocation1 [shape = 'u32[144,128]{1,0:T(1,128)}', space=vmem, size = 0x12000, scoped, tag = 'internal scratch']
  #allocation2 [shape = 'f32[16,32]{1,0:T(8,128)}', space=vmem, size = 0x2000, scoped, tag = 'scratch operand']
  %s0 = inlined_call_operand.vmem [shape: f32[16,32], index: 0, kind: input, shape index: {}]
  %s1 = inlined_call_operand.vmem [shape: bf16[32,16], index: 1, kind: input, shape index: {}]
  %s2 = inlined_call_operand.vmem [shape: f32[1,16], index: 2, kind: input, shape index: {}]
  %s3 = inlined_call_operand.vmem [shape: bf16[16,32], index: 3, kind: input, shape index: {}]
  %s4 = inlined_call_operand.vmem [shape: f32[1,32], index: 4, kind: input, shape index: {}]
  %s5 = inlined_call_operand.vmem [shape: f32[1,32], index: 5, kind: input, shape index: {}]
  %s6 = inlined_call_operand.vmem [shape: f32[1,32], index: 6, kind: input, shape index: {}]
  %s7 = inlined_call_operand.hbm [shape: f32[16,32], index: 7, kind: output, shape index: {}]
  %s8 = sld [smem:[#allocation0]]
  $region46: #{tpu_custom_call.1} parent=0
    _
  %s10 = ssub.s32 1, %s8
  %s11 = scalar_select 0, %s10, %s8
  $region1: #{tpu_custom_call.1} parent=0
    #allocation3 [shape = 'u8[8192]{0}', space=vmem, size = 0x2000, scoped, tag = 'output window, operand 0, single buffered']
    #allocation4 [shape = 's32[1]{0}', space=sflag, size = 0x4, scoped, tag = 'scoped memory for tpu_custom_call.1']
    %12 = vsyncpa [#allocation4], 0
    // Predicated region
    $region2: #{tpu_custom_call.1} parent=1 // pred_check
      _
    $region3: #{tpu_custom_call.1} parent=1 // pred_check_branch
      %14 = sbr.rel (0) target = $region5
    $region4: #{tpu_custom_call.1} parent=1 // pred_region
      _
    $region5: #{tpu_custom_call.1} parent=1 // pred_fallthru
      _
    // Predicated region
    $region6: #{tpu_custom_call.1} parent=1 // pred_check
      _
    $region7: #{tpu_custom_call.1} parent=1 // pred_check_branch
      %16 = sbr.rel (0) target = $region9
    $region8: #{tpu_custom_call.1} parent=1 // pred_region
      _
    $region9: #{tpu_custom_call.1} parent=1 // pred_fallthru
      _
    // Predicated region
    $region10: #{tpu_custom_call.1} parent=1 // pred_check
      _
    $region11: #{tpu_custom_call.1} parent=1 // pred_check_branch
      %18 = sbr.rel (0) target = $region13
    $region12: #{tpu_custom_call.1} parent=1 // pred_region
      _
    $region13: #{tpu_custom_call.1} parent=1 // pred_fallthru
      _
    // Predicated region
    $region14: #{tpu_custom_call.1} parent=1 // pred_check
      _
    $region15: #{tpu_custom_call.1} parent=1 // pred_check_branch
      %20 = sbr.rel (0) target = $region17
    $region16: #{tpu_custom_call.1} parent=1 // pred_region
      _
    $region17: #{tpu_custom_call.1} parent=1 // pred_fallthru
      _
    // Predicated region
    $region18: #{tpu_custom_call.1} parent=1 // pred_check
      _
    $region19: #{tpu_custom_call.1} parent=1 // pred_check_branch
      %22 = sbr.rel (0) target = $region21
    $region20: #{tpu_custom_call.1} parent=1 // pred_region
      _
    $region21: #{tpu_custom_call.1} parent=1 // pred_fallthru
      _
    // Predicated region
    $region22: #{tpu_custom_call.1} parent=1 // pred_check
      _
    $region23: #{tpu_custom_call.1} parent=1 // pred_check_branch
      %24 = sbr.rel (0) target = $region25
    $region24: #{tpu_custom_call.1} parent=1 // pred_region
      _
    $region25: #{tpu_custom_call.1} parent=1 // pred_fallthru
      _
    // Predicated region
    $region26: #{tpu_custom_call.1} parent=1 // pred_check
      _
    $region27: #{tpu_custom_call.1} parent=1 // pred_check_branch
      %26 = sbr.rel (0) target = $region29
    $region28: #{tpu_custom_call.1} parent=1 // pred_region
      _
    $region29: #{tpu_custom_call.1} parent=1 // pred_fallthru
      _
    %v28 = vld [vmem:[%s0] sm:$0xff]
    %v29 = vld [vmem:[%s0 + $0x8] sm:$0xff]
    %v30 = vpack.c.bf16 %v29, %v28
    %p31 = scmp.eq.s32.totalorder 0, 0
    // Predicated region
    $region30: #{tpu_custom_call.1} parent=1 // pred_check
      %p32 = pneg %p31
    $region31: #{tpu_custom_call.1} parent=1 // pred_check_branch
      %34 = sbr.rel (%p32) target = $region33
    $region32: #{tpu_custom_call.1} parent=1 // pred_region
      %v35 = vld [vmem:[%s4] sm:$0x1]
      %v37 = vlaneseq
      %v38 = vshrl.u32 %v37, 7
      %v39 = vsub.s32 0, %v38
      %v40 = vrot.slane %v35, %v39
      %v42 = vadd.f32 %v28, %v40
      %v43 = vadd.f32 %v29, %v40
      %vm44 = vcmask 261120
      %45 = vst.msk [vmem:[#allocation2] sm:$0xff] %vm44, %v42
      %46 = vst.msk [vmem:[#allocation2 + $0x8] sm:$0xff] %vm44, %v43
    $region33: #{tpu_custom_call.1} parent=1 // pred_fallthru
      _
    %v47 = vld [vmem:[%s1] sm:$0xf]
    %v48 = vld [vmem:[%s1 + $0x4] sm:$0xf]
    %v49 = vld [vmem:[%s1 + $0x8] sm:$0xf]
    %v50 = vld [vmem:[%s1 + $0xc] sm:$0xf]
    %v51 = vld [vmem:[%s2] sm:$0x1]
    %v53 = vlaneseq
    %v54 = vshrl.u32 %v53, 7
    %v55 = vsub.s32 0, %v54
    %v56 = vrot.slane %v51, %v55
    %v62 = vunpack.c.l.b16 %v47
    %v63 = vunpack.c.l.b16 %v48
    %v64 = vunpack.c.l.b16 %v49
    %v65 = vunpack.c.l.b16 %v50
    %v66 = vpack.c.b16 %v63, %v62
    %v67 = vpack.c.b16 %v65, %v64
    %vm70 = vcmask 261120
    %v72 = vsel %vm70, %v30, 0
    %74 = vmatprep.subr.bf16.mxu0 0
    %75 = vmatpush1.bf16.msra.mxu0 0
    %76 = vmatprep.subr.bf16.mxu0 0
    %77 = vmatpush1.bf16.msra.mxu0 0
    %78 = vmatprep.subr.bf16.mxu0 0
    %79 = vmatpush1.bf16.msra.mxu0 0
    %80 = vmatprep.subr.bf16.mxu0 0
    %81 = vmatpush1.bf16.msra.mxu0 0
    %82 = vmatprep.subr.bf16.mxu0 0
    %83 = vmatpush1.bf16.msra.mxu0 0
    %84 = vmatprep.subr.bf16.mxu0 0
    %85 = vmatpush1.bf16.msra.mxu0 0
    %86 = vmatprep.subr.bf16.mxu0 0
    %87 = vmatpush1.bf16.msra.mxu0 %v67
    %88 = vmatprep.subr.bf16.mxu0 0
    %89 = vmatpush1.bf16.msra.mxu0 %v66
    %90 = vmatprep.subr.bf16.mxu0 0
    %91 = vmatpush2.bf16.msra.mxu0 0
    %92 = vmatprep.subr.bf16.mxu0 0
    %93 = vmatpush2.bf16.msra.mxu0 0
    %94 = vmatprep.subr.bf16.mxu0 0
    %95 = vmatpush2.bf16.msra.mxu0 0
    %96 = vmatprep.subr.bf16.mxu0 0
    %97 = vmatpush2.bf16.msra.mxu0 0
    %98 = vmatprep.subr.bf16.mxu0 0
    %99 = vmatpush2.bf16.msra.mxu0 0
    %100 = vmatprep.subr.bf16.mxu0 0
    %101 = vmatpush2.bf16.msra.mxu0 0
    %102 = vmatprep.subr.bf16.mxu0 0
    %103 = vmatpush2.bf16.msra.mxu0 0
    %104 = vmatprep.subr.bf16.mxu0 0
    %105 = vmatpush2.bf16.msra.mxu0 0
    %106 = vmatprep.mubr.bf16.mxu0 0
    %107 = vmatmul.mubr.bf16.gmra.mxu0 %v72
    %v108 = vpop.f32.mrf.mxu0
    %v109 = vadd.f32 %v56, %v108
    %v110 = vpop.f32.mrf.mxu0
    %v111 = vpop.f32.mrf.mxu0
    %v112 = vadd.f32 %v56, %v111
    %v113 = vpop.f32.mrf.mxu0
    %114 = vdwg.mxu0
    %v115 = vmul.f32 %v109, 0.5
    %v116 = vmul.f32 %v112, 0.5
    %v117 = vmul.f32 %v109, 0.70710677
    %v118 = vmul.f32 %v112, 0.70710677
    %v119 = verf.f32.pop %v117
    %v120 = verf.f32.pop %v118
    %v121 = vadd.f32 %v119, 1.0
    %v122 = vadd.f32 %v120, 1.0
    %v123 = vmul.f32 %v115, %v121
    %v124 = vmul.f32 %v116, %v122
    %v125 = vld [vmem:[#allocation2] sm:$0xff]
    %v126 = vld [vmem:[#allocation2 + $0x8] sm:$0xff]
    %v127 = vpack.c.bf16 %v124, %v123
    %v128 = vld [vmem:[%s3] sm:$0xf]
    %v129 = vld [vmem:[%s3 + $0x4] sm:$0xf]
    %v132 = vunpack.c.l.b16 %v128
    %v133 = vunpack.c.l.b16 %v129
    %v134 = vpack.c.b16 %v133, %v132
    %vm136 = vcmask 130048
    %v138 = vsel %vm136, %v127, 0
    %140 = vmatprep.subr.bf16.mxu0 0
    %141 = vmatpush1.bf16.msra.mxu0 0
    %142 = vmatprep.subr.bf16.mxu0 0
    %143 = vmatpush1.bf16.msra.mxu0 0
    %144 = vmatprep.subr.bf16.mxu0 0
    %145 = vmatpush1.bf16.msra.mxu0 0
    %146 = vmatprep.subr.bf16.mxu0 0
    %147 = vmatpush1.bf16.msra.mxu0 0
    %148 = vmatprep.subr.bf16.mxu0 0
    %149 = vmatpush1.bf16.msra.mxu0 0
    %150 = vmatprep.subr.bf16.mxu0 0
    %151 = vmatpush1.bf16.msra.mxu0 0
    %152 = vmatprep.subr.bf16.mxu0 0
    %153 = vmatpush1.bf16.msra.mxu0 0
    %154 = vmatprep.subr.bf16.mxu0 0
    %155 = vmatpush1.bf16.msra.mxu0 %v134
    %156 = vmatprep.subr.bf16.mxu0 0
    %157 = vmatpush2.bf16.msra.mxu0 0
    %158 = vmatprep.subr.bf16.mxu0 0
    %159 = vmatpush2.bf16.msra.mxu0 0
    %160 = vmatprep.subr.bf16.mxu0 0
    %161 = vmatpush2.bf16.msra.mxu0 0
    %162 = vmatprep.subr.bf16.mxu0 0
    %163 = vmatpush2.bf16.msra.mxu0 0
    %164 = vmatprep.subr.bf16.mxu0 0
    %165 = vmatpush2.bf16.msra.mxu0 0
    %166 = vmatprep.subr.bf16.mxu0 0
    %167 = vmatpush2.bf16.msra.mxu0 0
    %168 = vmatprep.subr.bf16.mxu0 0
    %169 = vmatpush2.bf16.msra.mxu0 0
    %170 = vmatprep.subr.bf16.mxu0 0
    %171 = vmatpush2.bf16.msra.mxu0 0
    %172 = vmatprep.mubr.bf16.mxu0 0
    %173 = vmatmul.mubr.bf16.gmra.mxu0 %v138
    %v174 = vpop.f32.mrf.mxu0
    %v175 = vadd.f32 0.0, %v174
    %v176 = vpop.f32.mrf.mxu0
    %v177 = vpop.f32.mrf.mxu0
    %v178 = vadd.f32 0.0, %v177
    %v179 = vpop.f32.mrf.mxu0
    %180 = vdwg.mxu0
    %v181 = vadd.f32 %v125, %v175
    %v182 = vadd.f32 %v126, %v178
    %183 = vst.msk [vmem:[#allocation2] sm:$0xff] %vm70, %v181
    %184 = vst.msk [vmem:[#allocation2 + $0x8] sm:$0xff] %vm70, %v182
    // Predicated region
    $region34: #{tpu_custom_call.1} parent=1 // pred_check
      %p185 = pneg %p31
    $region35: #{tpu_custom_call.1} parent=1 // pred_check_branch
      %187 = sbr.rel (%p185) target = $region37
    $region36: #{tpu_custom_call.1} parent=1 // pred_region
      %v188 = vld [vmem:[#allocation2] sm:$0xff]
      %v189 = vld [vmem:[#allocation2 + $0x8] sm:$0xff]
      %v190 = vsel %vm70, %v188, 0.0
      %191 = vadd.xlane.f32.xlu0 %v190
      %v192 = vpop.xlane.xlu0 %191
      %v193 = vsel %vm70, %v189, 0.0
      %194 = vadd.xlane.f32.xlu0 %v193
      %v195 = vpop.xlane.xlu0 %194
      %v196 = vrcp.pop 32.0
      %v197 = vmul.f32 %v192, %v196
      %v198 = vmul.f32 %v195, %v196
      %v199 = vsub.f32 %v188, %v197
      %v200 = vsub.f32 %v189, %v198
      %v201 = vmul.f32 %v199, %v199
      %v202 = vmul.f32 %v200, %v200
      %v203 = vsel %vm70, %v201, 0.0
      %204 = vadd.xlane.f32.xlu0 %v203
      %v205 = vpop.xlane.xlu0 %204
      %v206 = vsel %vm70, %v202, 0.0
      %207 = vadd.xlane.f32.xlu0 %v206
      %v208 = vpop.xlane.xlu0 %207
      %v209 = vmul.f32 %v205, %v196
      %v210 = vmul.f32 %v208, %v196
      %v211 = vadd.f32 %v209, 1e-05
      %v212 = vadd.f32 %v210, 1e-05
      %v213 = vrsqrt.pop %v211
      %v214 = vrsqrt.pop %v212
      %v215 = vmul.f32 %v199, %v213
      %v216 = vmul.f32 %v200, %v214
      %v217 = vld [vmem:[%s5] sm:$0x1]
      %v219 = vlaneseq
      %v220 = vshrl.u32 %v219, 7
      %v221 = vsub.s32 0, %v220
      %v222 = vrot.slane %v217, %v221
      %v224 = vmul.f32 %v215, %v222
      %v225 = vmul.f32 %v216, %v222
      %v226 = vld [vmem:[%s6] sm:$0x1]
      %v228 = vlaneseq
      %v229 = vshrl.u32 %v228, 7
      %v230 = vsub.s32 0, %v229
      %v231 = vrot.slane %v226, %v230
      %v233 = vadd.f32 %v224, %v231
      %v234 = vadd.f32 %v225, %v231
      %235 = vst.msk [vmem:[#allocation3] sm:$0xff] %vm70, %v233
      %236 = vst.msk [vmem:[#allocation3 + $0x8] sm:$0xff] %vm70, %v234
    $region37: #{tpu_custom_call.1} parent=1 // pred_fallthru
      _
    // Predicated region
    $region38: #{tpu_custom_call.1} parent=1 // pred_check
      _
    $region39: #{tpu_custom_call.1} parent=1 // pred_check_branch
      %238 = sbr.rel (0) target = $region41
    $region40: #{tpu_custom_call.1} parent=1 // pred_region
      %s240 = ssub.s32 256, 256
      %241 = vsyncadd [#allocation4], %s240
      %s242 = sshll.u32 [#allocation3], 4
      %s243 = int_to_ptr.vmem [resolvable:$true] %s242
      %248 = dma.vmem_to_hbm [thread:$0]  %s243, 256, %s7, [#allocation4], 128, 128, 8
    $region41: #{tpu_custom_call.1} parent=1 // pred_fallthru
      _
    // Predicated region
    $region42: #{tpu_custom_call.1} parent=1 // pred_check
      _
    $region43: #{tpu_custom_call.1} parent=1 // pred_check_branch
      %250 = sbr.rel (0) target = $region45
    $region44: #{tpu_custom_call.1} parent=1 // pred_region
      %251 = dma.done [#allocation4], 256
    $region45: #{tpu_custom_call.1} parent=1 // pred_fallthru
      _
    %252 = vsyncpa [#allocation4], 1

</llo_original>
